<compile_context>
chip_gen: v5e
topology: v5e:2x2
jax: 0.10.0
libtpu: 0.0.40
codegen_flags: <defaults>
</compile_context>

<pallas_src>
import functools

import jax
import jax.numpy as jnp
import numpy as np
from jax.experimental import pallas as pl
from jax.experimental.pallas import tpu as pltpu


def _attention_kernel(*refs, has_mask, matmul_dtype):
    # refs (has_mask=True):  h, wt, b, v, mask, ctx_out, w_out
    # refs (has_mask=False): h, wt, b, v,       ctx_out, w_out
    if has_mask:
        h_ref, wt_ref, b_ref, v_ref, mask_ref, ctx_ref, w_ref = refs
    else:
        h_ref, wt_ref, b_ref, v_ref, ctx_ref, w_ref = refs
        mask_ref = None

    tb, s, hdim = h_ref.shape

    h = h_ref[...].astype(jnp.float32)                     # (TB, S, H)
    b = b_ref[...].astype(jnp.float32)                     # (1, H)
    v = v_ref[...].astype(jnp.float32)                     # (1, H) row

    # energy = tanh(hidden @ W^T + b): flatten batch+seq so the MXU sees
    # M = TB*S rows instead of S.
    h2 = h.reshape(tb * s, hdim).astype(matmul_dtype)
    wt = wt_ref[...].astype(matmul_dtype)                  # (H, H)
    energy = jnp.tanh(
        jnp.dot(h2, wt, preferred_element_type=jnp.float32) + b)  # (TB*S, H) f32
    energy = energy.reshape(tb, s, hdim)                   # (TB, S, H)

    # scores = energy @ v^T as a VPU multiply + lane reduction (no N=1 matmul,
    # no (S,1)->(1,S) relayout): directly (TB, S) with S on the lane axis.
    scores = jnp.sum(energy * v, axis=-1)                  # (TB, S)

    if mask_ref is not None:
        scores = jnp.where(mask_ref[...] == 0, jnp.float32(-1e10), scores)

    # softmax over the sequence axis (torch dim=1 == last axis here)
    mx = jnp.max(scores, axis=-1, keepdims=True)
    p = jnp.exp(scores - mx)
    denom = jnp.sum(p, axis=-1, keepdims=True)
    attn = p * pl.reciprocal(denom, approx=True)           # (TB, S)

    # context = attn @ hidden as a VPU weighted sum over S (no M=1 matmul)
    ctx = jnp.sum(attn[:, :, None] * h, axis=1)            # (TB, H)

    w_ref[...] = attn.astype(w_ref.dtype)
    ctx_ref[...] = ctx.astype(ctx_ref.dtype)


def _round_up(x, m):
    return (x + m - 1) // m * m


def _choose_block_b(B, S, H):
    """Batch tile: target ~256 MXU rows (TB*S), keep sublane alignment (>=8),
    don't blow up tiny batches, and keep the double-buffered hidden block
    comfortably under the scoped VMEM limit (<= ~4 MiB per buffer pair)."""
    target = max(8, pl.cdiv(256, S))
    vmem_cap = max(8, (4 << 20) // max(1, 2 * S * H * 4))
    tb = min(target, vmem_cap, _round_up(B, 8))
    return max(8, tb)


def attention_pallas(hidden, w_attn, b_attn, v_w, mask=None,
                     *, block_b=None, matmul_dtype=jnp.float32):
    """hidden: (B, S, H); w_attn: (H, H) torch layout (out x in); b_attn: (H,);
    v_w: (1, H) (nn.Linear(H, 1, bias=False).weight); mask: optional (B, S).
    Returns (context (B, H), attn_weights (B, S)), both float32.
    On v6e/v7x pass matmul_dtype=jnp.bfloat16 to feed the MXU bf16 inputs."""
    B, S, H = hidden.shape
    wt = jnp.asarray(w_attn, jnp.float32).T               # (H, H) = W^T
    b = jnp.asarray(b_attn, jnp.float32).reshape(1, H)    # (1, H)
    v = jnp.asarray(v_w, jnp.float32).reshape(1, H)       # (1, H) lane row

    tb = _choose_block_b(B, S, H) if block_b is None else block_b
    Bp = _round_up(B, tb)

    hidden_p = hidden
    if Bp != B:
        hidden_p = jnp.pad(hidden, ((0, Bp - B), (0, 0), (0, 0)))

    has_mask = mask is not None
    inputs = [hidden_p, wt, b, v]
    in_specs = [
        pl.BlockSpec((tb, S, H), lambda i: (i, 0, 0)),     # hidden batch tile
        pl.BlockSpec((H, H), lambda i: (0, 0)),            # W^T (resident)
        pl.BlockSpec((1, H), lambda i: (0, 0)),            # bias
        pl.BlockSpec((1, H), lambda i: (0, 0)),            # v row
    ]
    if has_mask:
        mask_p = jnp.asarray(mask, jnp.int32)
        if Bp != B:
            mask_p = jnp.pad(mask_p, ((0, Bp - B), (0, 0)), constant_values=1)
        inputs.append(mask_p)
        in_specs.append(pl.BlockSpec((tb, S), lambda i: (i, 0)))

    grid_spec = pltpu.PrefetchScalarGridSpec(
        num_scalar_prefetch=0,
        grid=(Bp // tb,),
        in_specs=in_specs,
        out_specs=[
            pl.BlockSpec((tb, H), lambda i: (i, 0)),       # context
            pl.BlockSpec((tb, S), lambda i: (i, 0)),       # attn weights
        ],
    )

    kernel = functools.partial(_attention_kernel, has_mask=has_mask,
                               matmul_dtype=matmul_dtype)
    context, attn_weights = pl.pallas_call(
        kernel,
        out_shape=(
            jax.ShapeDtypeStruct((Bp, H), jnp.float32),
            jax.ShapeDtypeStruct((Bp, S), jnp.float32),
        ),
        grid_spec=grid_spec,
        compiler_params=pltpu.CompilerParams(
            dimension_semantics=("parallel",)),            # shards batch tiles
    )(*inputs)
    return context[:B], attn_weights[:B]


def _attention_ref(hidden, w_attn, b_attn, v_w, mask=None):
    """Pure-JAX reference mirroring the PyTorch forward."""
    energy = jnp.tanh(hidden @ w_attn.T + b_attn)          # (B, S, H)
    scores = (energy @ v_w.T)[..., 0]                      # (B, S)
    if mask is not None:
        scores = jnp.where(mask == 0, -1e10, scores)
    attn = jax.nn.softmax(scores, axis=1)                  # (B, S)
    context = jnp.einsum("bs,bsh->bh", attn, hidden)       # (B, H)
    return context, attn


if __name__ == "__main__":
    B, S, H = 2, 8, 32  # batch, seq, hidden_size

    key = jax.random.PRNGKey(0)
    k_h, k_w, k_b, k_v, k_m = jax.random.split(key, 5)
    hidden = jax.random.normal(k_h, (B, S, H), jnp.float32)
    w_attn = jax.random.normal(k_w, (H, H), jnp.float32) * 0.1   # nn.Linear(H, H).weight
    b_attn = jax.random.normal(k_b, (H,), jnp.float32) * 0.1     # nn.Linear(H, H).bias
    v_w = jax.random.normal(k_v, (1, H), jnp.float32) * 0.1      # nn.Linear(H, 1, bias=False).weight

    # --- mask=None path (specialized: no mask DMA, no where) ---
    context, attn_weights = attention_pallas(hidden, w_attn, b_attn, v_w, mask=None)
    jax.block_until_ready((context, attn_weights))
    ctx_ref, attn_ref = _attention_ref(hidden, w_attn, b_attn, v_w, mask=None)
    np.testing.assert_allclose(np.asarray(context), np.asarray(ctx_ref),
                               rtol=5e-3, atol=5e-3)
    np.testing.assert_allclose(np.asarray(attn_weights), np.asarray(attn_ref),
                               rtol=5e-3, atol=5e-3)

    # --- masked path ---
    mask = (jax.random.uniform(k_m, (B, S)) > 0.3).astype(jnp.int32)
    mask = mask.at[:, 0].set(1)   # keep at least one position per row
    ctx_m, attn_m = attention_pallas(hidden, w_attn, b_attn, v_w, mask=mask)
    jax.block_until_ready((ctx_m, attn_m))
    ctx_mr, attn_mr = _attention_ref(hidden, w_attn, b_attn, v_w, mask=mask)
    np.testing.assert_allclose(np.asarray(ctx_m), np.asarray(ctx_mr),
                               rtol=5e-3, atol=5e-3)
    np.testing.assert_allclose(np.asarray(attn_m), np.asarray(attn_mr),
                               rtol=5e-3, atol=5e-3)

    print("KERNEL_OK")
</pallas_src>

<mosaic_0001>
module attributes {stable_mosaic.version = 11 : i64} {
  func.func @_attention_kernel(%arg0: i32, %arg1: memref<8x8x32xf32, #tpu.memory_space<vmem>>, %arg2: memref<32x32xf32, #tpu.memory_space<vmem>>, %arg3: memref<1x32xf32, #tpu.memory_space<vmem>>, %arg4: memref<1x32xf32, #tpu.memory_space<vmem>>, %arg5: memref<8x32xf32, #tpu.memory_space<vmem>>, %arg6: memref<8x8xf32, #tpu.memory_space<vmem>>) attributes {dimension_semantics = [#tpu.dimension_semantics<parallel>], iteration_bounds = array<i64: 1>, scalar_prefetch = 0 : i64, scratch_operands = 0 : i64, tpu.core_type = #tpu.core_type<tc>, window_params = [{transform_indices = @transform_0, window_bounds = array<i64: 8, 8, 32>}, {pipeline_mode = #tpu.pipeline_mode<synchronous>, transform_indices = @transform_1, window_bounds = array<i64: 32, 32>}, {pipeline_mode = #tpu.pipeline_mode<synchronous>, transform_indices = @transform_2, window_bounds = array<i64: 1, 32>}, {pipeline_mode = #tpu.pipeline_mode<synchronous>, transform_indices = @transform_3, window_bounds = array<i64: 1, 32>}, {transform_indices = @transform_4, window_bounds = array<i64: 8, 32>}, {transform_indices = @transform_5, window_bounds = array<i64: 8, 8>}]} {
    %c0 = arith.constant 0 : index
    %c0_0 = arith.constant 0 : index
    %c0_1 = arith.constant 0 : index
    %0 = vector.load %arg1[%c0, %c0_0, %c0_1] : memref<8x8x32xf32, #tpu.memory_space<vmem>>, vector<8x8x32xf32>
    %c0_2 = arith.constant 0 : index
    %c0_3 = arith.constant 0 : index
    %1 = vector.load %arg3[%c0_2, %c0_3] : memref<1x32xf32, #tpu.memory_space<vmem>>, vector<1x32xf32>
    %c0_4 = arith.constant 0 : index
    %c0_5 = arith.constant 0 : index
    %2 = vector.load %arg4[%c0_4, %c0_5] : memref<1x32xf32, #tpu.memory_space<vmem>>, vector<1x32xf32>
    %3 = vector.shape_cast %0 : vector<8x8x32xf32> to vector<64x32xf32>
    %c0_6 = arith.constant 0 : index
    %c0_7 = arith.constant 0 : index
    %4 = vector.load %arg2[%c0_6, %c0_7] : memref<32x32xf32, #tpu.memory_space<vmem>>, vector<32x32xf32>
    %cst = arith.constant dense<0.000000e+00> : vector<64x32xf32>
    %5 = tpu.matmul %3, %4, %cst {dimension_numbers = #tpu.dot_dimension_numbers<[1], [0], [0], [1], [0, 0, 1, 1], [], []>} : vector<64x32xf32>, vector<32x32xf32>, vector<64x32xf32> -> vector<64x32xf32>
    %6 = vector.broadcast %1 : vector<1x32xf32> to vector<64x32xf32>
    %7 = arith.addf %5, %6 : vector<64x32xf32>
    %8 = math.tanh %7 : vector<64x32xf32>
    %9 = vector.shape_cast %8 : vector<64x32xf32> to vector<8x8x32xf32>
    %10 = vector.shape_cast %2 : vector<1x32xf32> to vector<1x1x32xf32>
    %11 = vector.broadcast %10 : vector<1x1x32xf32> to vector<8x8x32xf32>
    %12 = arith.mulf %9, %11 : vector<8x8x32xf32>
    %cst_8 = arith.constant dense<0.000000e+00> : vector<8x8xf32>
    %13 = vector.multi_reduction <add>, %12, %cst_8 [2] : vector<8x8x32xf32> to vector<8x8xf32>
    %cst_9 = arith.constant dense<0xFF800000> : vector<8xf32>
    %14 = vector.multi_reduction <maximumf>, %13, %cst_9 [1] : vector<8x8xf32> to vector<8xf32>
    %15 = vector.shape_cast %14 : vector<8xf32> to vector<8x1xf32>
    %16 = vector.broadcast %15 : vector<8x1xf32> to vector<8x8xf32>
    %17 = arith.subf %13, %16 : vector<8x8xf32>
    %18 = math.exp %17 : vector<8x8xf32>
    %cst_10 = arith.constant dense<0.000000e+00> : vector<8xf32>
    %19 = vector.multi_reduction <add>, %18, %cst_10 [1] : vector<8x8xf32> to vector<8xf32>
    %20 = vector.shape_cast %19 : vector<8xf32> to vector<8x1xf32>
    %21 = tpu.reciprocal %20 {approx = true} : vector<8x1xf32> -> vector<8x1xf32>
    %22 = vector.broadcast %21 : vector<8x1xf32> to vector<8x8xf32>
    %23 = arith.mulf %18, %22 : vector<8x8xf32>
    %24 = vector.shape_cast %23 : vector<8x8xf32> to vector<8x8x1xf32>
    %25 = vector.broadcast %24 : vector<8x8x1xf32> to vector<8x8x32xf32>
    %26 = arith.mulf %25, %0 : vector<8x8x32xf32>
    %cst_11 = arith.constant dense<0.000000e+00> : vector<8x32xf32>
    %27 = vector.multi_reduction <add>, %26, %cst_11 [1] : vector<8x8x32xf32> to vector<8x32xf32>
    %c0_12 = arith.constant 0 : index
    %c0_13 = arith.constant 0 : index
    %28 = vector.load %arg6[%c0_12, %c0_13] : memref<8x8xf32, #tpu.memory_space<vmem>>, vector<8x8xf32>
    tpu.vector_store %arg6[%c0_12, %c0_13], %23 {strides = array<i32>} : memref<8x8xf32, #tpu.memory_space<vmem>>, vector<8x8xf32>,
    %c0_14 = arith.constant 0 : index
    %c0_15 = arith.constant 0 : index
    %29 = vector.load %arg5[%c0_14, %c0_15] : memref<8x32xf32, #tpu.memory_space<vmem>>, vector<8x32xf32>
    tpu.vector_store %arg5[%c0_14, %c0_15], %27 {strides = array<i32>} : memref<8x32xf32, #tpu.memory_space<vmem>>, vector<8x32xf32>,
    return
  }
  func.func @transform_0(%arg0: i32) -> (i32, i32, i32) {
    %c0_i32 = arith.constant 0 : i32
    %c0_i32_0 = arith.constant 0 : i32
    %c0_i32_1 = arith.constant 0 : i32
    return %arg0, %c0_i32, %c0_i32_0 : i32, i32, i32
  }
  func.func @transform_1(%arg0: i32) -> (i32, i32) {
    %c0_i32 = arith.constant 0 : i32
    %c0_i32_0 = arith.constant 0 : i32
    %c0_i32_1 = arith.constant 0 : i32
    return %c0_i32, %c0_i32_0 : i32, i32
  }
  func.func @transform_2(%arg0: i32) -> (i32, i32) {
    %c0_i32 = arith.constant 0 : i32
    %c0_i32_0 = arith.constant 0 : i32
    %c0_i32_1 = arith.constant 0 : i32
    return %c0_i32, %c0_i32_0 : i32, i32
  }
  func.func @transform_3(%arg0: i32) -> (i32, i32) {
    %c0_i32 = arith.constant 0 : i32
    %c0_i32_0 = arith.constant 0 : i32
    %c0_i32_1 = arith.constant 0 : i32
    return %c0_i32, %c0_i32_0 : i32, i32
  }
  func.func @transform_4(%arg0: i32) -> (i32, i32) {
    %c0_i32 = arith.constant 0 : i32
    %c0_i32_0 = arith.constant 0 : i32
    return %arg0, %c0_i32 : i32, i32
  }
  func.func @transform_5(%arg0: i32) -> (i32, i32) {
    %c0_i32 = arith.constant 0 : i32
    %c0_i32_0 = arith.constant 0 : i32
    return %arg0, %c0_i32 : i32, i32
  }
}

</mosaic_0001>

<llo_original>
// kernel: tpu_custom_call.1
$region0: #{tpu_custom_call.1}
  #allocation0 [shape = 'u32[]', space=smem, size = 0x4, offset = 0x4, fixed_abs, tag = 'smem constant byte address 0x4 - core index']
  #allocation1 [shape = 'u32[72,128]{1,0:T(1,128)}', space=vmem, size = 0x9000, scoped, tag = 'internal scratch']
  %s0 = inlined_call_operand.hbm [shape: f32[8,8,32], index: 0, kind: input, shape index: {}]
  %s1 = inlined_call_operand.hbm [shape: f32[32,32], index: 1, kind: input, shape index: {}]
  %s2 = inlined_call_operand.vmem [shape: f32[1,32], index: 2, kind: input, shape index: {}]
  %s3 = inlined_call_operand.vmem [shape: f32[1,32], index: 3, kind: input, shape index: {}]
  %s4 = inlined_call_operand.hbm [shape: f32[8,32], index: 4, kind: output, shape index: {0}]
  %s5 = inlined_call_operand.hbm [shape: f32[8,8], index: 5, kind: output, shape index: {1}]
  %6 = xla_tuple %s4, %s5
  %s7 = sld [smem:[#allocation0]]
  $region42: #{tpu_custom_call.1} parent=0
    _
  %s9 = ssub.s32 1, %s7
  %s10 = scalar_select 0, %s9, %s7
  $region1: #{tpu_custom_call.1} parent=0
    #allocation2 [shape = 'u8[32768]{0}', space=vmem, size = 0x8000, scoped, tag = 'input window, operand 0, single buffered']
    #allocation3 [shape = 's32[1]{0}', space=sflag, size = 0x4, scoped, tag = 'scoped memory for tpu_custom_call.1']
    #allocation4 [shape = 's32[1]{0}', space=sflag, size = 0x4, scoped, tag = 'scoped memory for tpu_custom_call.1']
    #allocation5 [shape = 'u8[16384]{0}', space=vmem, size = 0x4000, scoped, tag = 'input window, operand 1, single buffered']
    #allocation6 [shape = 's32[1]{0}', space=sflag, size = 0x4, scoped, tag = 'scoped memory for tpu_custom_call.1']
    #allocation7 [shape = 'u8[4096]{0}', space=vmem, size = 0x1000, scoped, tag = 'output window, operand 0, single buffered']
    #allocation8 [shape = 'u8[4096]{0}', space=vmem, size = 0x1000, scoped, tag = 'output window, operand 1, single buffered']
    #allocation9 [shape = 's32[1]{0}', space=sflag, size = 0x4, scoped, tag = 'scoped memory for tpu_custom_call.1']
    %11 = vsyncpa [#allocation3], 0
    %12 = vsyncpa [#allocation6], 0
    %13 = vsyncpa [#allocation4], 0
    %14 = vsyncpa [#allocation9], 0
    // Predicated region
    $region2: #{tpu_custom_call.1} parent=1 // pred_check
      _
    $region3: #{tpu_custom_call.1} parent=1 // pred_check_branch
      %16 = sbr.rel (0) target = $region5
    $region4: #{tpu_custom_call.1} parent=1 // pred_region
      %18 = vsyncadd [#allocation3], 0
      %s19 = sshll.u32 %s0, 4
      %s20 = int_to_ptr.hbm [resolvable:$true] %s19
      %s21 = sshll.u32 [#allocation2], 4
      %s22 = int_to_ptr.vmem [resolvable:$true] %s21
      %27 = dma.hbm_to_vmem [thread:$0]  %s20, 1024, %s22, [#allocation3], 128, 128, 8
    $region5: #{tpu_custom_call.1} parent=1 // pred_fallthru
      _
    // Predicated region
    $region6: #{tpu_custom_call.1} parent=1 // pred_check
      _
    $region7: #{tpu_custom_call.1} parent=1 // pred_check_branch
      %29 = sbr.rel (0) target = $region9
    $region8: #{tpu_custom_call.1} parent=1 // pred_region
      %31 = vsyncadd [#allocation6], 0
      %s32 = sshll.u32 %s1, 4
      %s33 = int_to_ptr.hbm [resolvable:$true] %s32
      %s34 = sshll.u32 [#allocation5], 4
      %s35 = int_to_ptr.vmem [resolvable:$true] %s34
      %40 = dma.hbm_to_vmem [thread:$0]  %s33, 512, %s35, [#allocation6], 128, 128, 8
    $region9: #{tpu_custom_call.1} parent=1 // pred_fallthru
      _
    // Predicated region
    $region10: #{tpu_custom_call.1} parent=1 // pred_check
      _
    $region11: #{tpu_custom_call.1} parent=1 // pred_check_branch
      %42 = sbr.rel (0) target = $region13
    $region12: #{tpu_custom_call.1} parent=1 // pred_region
      _
    $region13: #{tpu_custom_call.1} parent=1 // pred_fallthru
      _
    // Predicated region
    $region14: #{tpu_custom_call.1} parent=1 // pred_check
      _
    $region15: #{tpu_custom_call.1} parent=1 // pred_check_branch
      %44 = sbr.rel (0) target = $region17
    $region16: #{tpu_custom_call.1} parent=1 // pred_region
      _
    $region17: #{tpu_custom_call.1} parent=1 // pred_fallthru
      _
    // Predicated region
    $region18: #{tpu_custom_call.1} parent=1 // pred_check
      _
    $region19: #{tpu_custom_call.1} parent=1 // pred_check_branch
      %46 = sbr.rel (0) target = $region21
    $region20: #{tpu_custom_call.1} parent=1 // pred_region
      %48 = dma.done [#allocation3], 1024
    $region21: #{tpu_custom_call.1} parent=1 // pred_fallthru
      _
    // Predicated region
    $region22: #{tpu_custom_call.1} parent=1 // pred_check
      _
    $region23: #{tpu_custom_call.1} parent=1 // pred_check_branch
      %50 = sbr.rel (0) target = $region25
    $region24: #{tpu_custom_call.1} parent=1 // pred_region
      %52 = dma.done [#allocation6], 512
    $region25: #{tpu_custom_call.1} parent=1 // pred_fallthru
      _
    %v53 = vld [vmem:[#allocation2] sm:$0xff]
    %v54 = vld [vmem:[#allocation2 + $0x8] sm:$0xff]
    %v55 = vld [vmem:[#allocation2 + $0x10] sm:$0xff]
    %v56 = vld [vmem:[#allocation2 + $0x18] sm:$0xff]
    %v57 = vld [vmem:[#allocation2 + $0x20] sm:$0xff]
    %v58 = vld [vmem:[#allocation2 + $0x28] sm:$0xff]
    %v59 = vld [vmem:[#allocation2 + $0x30] sm:$0xff]
    %v60 = vld [vmem:[#allocation2 + $0x38] sm:$0xff]
    %v61 = vld [vmem:[%s2] sm:$0x1]
    %v62 = vld [vmem:[%s3] sm:$0x1]
    %v63 = vld [vmem:[#allocation5] sm:$0xff]
    %v64 = vld [vmem:[#allocation5 + $0x8] sm:$0xff]
    %v65 = vld [vmem:[#allocation5 + $0x10] sm:$0xff]
    %v66 = vld [vmem:[#allocation5 + $0x18] sm:$0xff]
    %v68 = vperm.slane %v61, 0
    %vm70 = vcmask 261120
    %v72 = vsel %vm70, %v53, 0
    %v75 = vsel %vm70, %v54, 0
    %v78 = vsel %vm70, %v55, 0
    %v81 = vsel %vm70, %v56, 0
    %v84 = vsel %vm70, %v57, 0
    %v87 = vsel %vm70, %v58, 0
    %v90 = vsel %vm70, %v59, 0
    %v93 = vsel %vm70, %v60, 0
    %95 = vmatpush.msra.mxu0 0.0
    %96 = vmatpush.msra.mxu0 0.0
    %97 = vmatpush.msra.mxu0 0.0
    %98 = vmatpush.msra.mxu0 0.0
    %99 = vmatpush.msra.mxu0 0.0
    %100 = vmatpush.msra.mxu0 0.0
    %101 = vmatpush.msra.mxu0 0.0
    %102 = vmatpush.msra.mxu0 0.0
    %103 = vmatpush.msra.mxu0 0.0
    %104 = vmatpush.msra.mxu0 0.0
    %105 = vmatpush.msra.mxu0 0.0
    %106 = vmatpush.msra.mxu0 0.0
    %107 = vmatpush.msra.mxu0 %v66
    %108 = vmatpush.msra.mxu0 %v65
    %109 = vmatpush.msra.mxu0 %v64
    %110 = vmatpush.msra.mxu0 %v63
    %111 = vmatmul.f32.gmra.mxu0 %v72
    %v112 = vpop.f32.mrf.mxu0
    %v113 = vadd.f32 %v68, %v112
    %114 = vmatmul.f32.gmra.mxu0 %v75
    %v115 = vpop.f32.mrf.mxu0
    %v116 = vadd.f32 %v68, %v115
    %117 = vmatmul.f32.gmra.mxu0 %v78
    %v118 = vpop.f32.mrf.mxu0
    %v119 = vadd.f32 %v68, %v118
    %120 = vmatmul.f32.gmra.mxu0 %v81
    %v121 = vpop.f32.mrf.mxu0
    %v122 = vadd.f32 %v68, %v121
    %123 = vmatmul.f32.gmra.mxu0 %v84
    %v124 = vpop.f32.mrf.mxu0
    %v125 = vadd.f32 %v68, %v124
    %126 = vmatmul.f32.gmra.mxu0 %v87
    %v127 = vpop.f32.mrf.mxu0
    %v128 = vadd.f32 %v68, %v127
    %129 = vmatmul.f32.gmra.mxu0 %v90
    %v130 = vpop.f32.mrf.mxu0
    %v131 = vadd.f32 %v68, %v130
    %132 = vmatmul.f32.gmra.mxu0 %v93
    %v133 = vpop.f32.mrf.mxu0
    %v134 = vadd.f32 %v68, %v133
    %135 = vdwg.mxu0
    %v136 = vtanh.pop %v113
    %v137 = vtanh.pop %v116
    %v138 = vtanh.pop %v119
    %v139 = vtanh.pop %v122
    %v140 = vtanh.pop %v125
    %v141 = vtanh.pop %v128
    %v142 = vtanh.pop %v131
    %v143 = vtanh.pop %v134
    %v145 = vperm.slane %v62, 0
    %v147 = vmul.f32 %v136, %v145
    %v148 = vmul.f32 %v137, %v145
    %v149 = vmul.f32 %v138, %v145
    %v150 = vmul.f32 %v139, %v145
    %v151 = vmul.f32 %v140, %v145
    %v152 = vmul.f32 %v141, %v145
    %v153 = vmul.f32 %v142, %v145
    %v154 = vmul.f32 %v143, %v145
    %v155 = vsel %vm70, %v147, 0.0
    %156 = vadd.xlane.f32.xlu0 %v155
    %v157 = vpop.xlane.xlu0 %156
    %v158 = vsel %vm70, %v148, 0.0
    %159 = vadd.xlane.f32.xlu0 %v158
    %v160 = vpop.xlane.xlu0 %159
    %v161 = vsel %vm70, %v149, 0.0
    %162 = vadd.xlane.f32.xlu0 %v161
    %v163 = vpop.xlane.xlu0 %162
    %v164 = vsel %vm70, %v150, 0.0
    %165 = vadd.xlane.f32.xlu0 %v164
    %v166 = vpop.xlane.xlu0 %165
    %v167 = vsel %vm70, %v151, 0.0
    %168 = vadd.xlane.f32.xlu0 %v167
    %v169 = vpop.xlane.xlu0 %168
    %v170 = vsel %vm70, %v152, 0.0
    %171 = vadd.xlane.f32.xlu0 %v170
    %v172 = vpop.xlane.xlu0 %171
    %v173 = vsel %vm70, %v153, 0.0
    %174 = vadd.xlane.f32.xlu0 %v173
    %v175 = vpop.xlane.xlu0 %174
    %v176 = vsel %vm70, %v154, 0.0
    %177 = vadd.xlane.f32.xlu0 %v176
    %v178 = vpop.xlane.xlu0 %177
    %v187 = vlaneseq
    %v188 = vand.u32 %v187, 127
    %v189 = vperm.slane %v157, %v188
    %v190 = vperm.slane %v160, %v188
    %v191 = vperm.slane %v163, %v188
    %v192 = vperm.slane %v166, %v188
    %v193 = vperm.slane %v169, %v188
    %v194 = vperm.slane %v172, %v188
    %v195 = vperm.slane %v175, %v188
    %v196 = vperm.slane %v178, %v188
    %vm197 = vcmask 1041409
    %v198 = vsel %vm197, %v190, %v189
    %vm199 = vcmask 1042434
    %v200 = vsel %vm199, %v191, %v198
    %vm201 = vcmask 1043459
    %v202 = vsel %vm201, %v192, %v200
    %vm203 = vcmask 1044484
    %v204 = vsel %vm203, %v193, %v202
    %vm205 = vcmask 1045509
    %v206 = vsel %vm205, %v194, %v204
    %vm207 = vcmask 1046534
    %v208 = vsel %vm207, %v195, %v206
    %vm209 = vcmask 1047559
    %v210 = vsel %vm209, %v196, %v208
    %vm212 = vcmask 64512
    %v213 = vsel %vm212, %v210, -inf
    %214 = vmax.xlane.f32.xlu0 %v213
    %v215 = vpop.xlane.xlu0 %214
    %v217 = vperm.slane %v215, 0
    %v218 = vperm.slane %v215, 1
    %v219 = vperm.slane %v215, 2
    %v220 = vperm.slane %v215, 3
    %v221 = vperm.slane %v215, 4
    %v222 = vperm.slane %v215, 5
    %v223 = vperm.slane %v215, 6
    %v224 = vperm.slane %v215, 7
    %v233 = vsub.f32 %v157, %v217
    %v234 = vsub.f32 %v160, %v218
    %v235 = vsub.f32 %v163, %v219
    %v236 = vsub.f32 %v166, %v220
    %v237 = vsub.f32 %v169, %v221
    %v238 = vsub.f32 %v172, %v222
    %v239 = vsub.f32 %v175, %v223
    %v240 = vsub.f32 %v178, %v224
    %v241 = vmul.f32 %v233, 1.442695
    %v242 = vpow.pop %v241
    %v243 = vmul.f32 %v234, 1.442695
    %v244 = vpow.pop %v243
    %v245 = vmul.f32 %v235, 1.442695
    %v246 = vpow.pop %v245
    %v247 = vmul.f32 %v236, 1.442695
    %v248 = vpow.pop %v247
    %v249 = vmul.f32 %v237, 1.442695
    %v250 = vpow.pop %v249
    %v251 = vmul.f32 %v238, 1.442695
    %v252 = vpow.pop %v251
    %v253 = vmul.f32 %v239, 1.442695
    %v254 = vpow.pop %v253
    %v255 = vmul.f32 %v240, 1.442695
    %v256 = vpow.pop %v255
    %265 = vset.pattern.permute.xlu0 0
    %266 = vperm.xlu0 %265, %v242
    %v267 = vpop.permute.xlu0 %266
    %268 = vset.pattern.permute.xlu0 0
    %269 = vperm.xlu0 %268, %v244
    %v270 = vpop.permute.xlu0 %269
    %271 = vset.pattern.permute.xlu0 0
    %272 = vperm.xlu0 %271, %v246
    %v273 = vpop.permute.xlu0 %272
    %274 = vset.pattern.permute.xlu0 0
    %275 = vperm.xlu0 %274, %v248
    %v276 = vpop.permute.xlu0 %275
    %277 = vset.pattern.permute.xlu0 0
    %278 = vperm.xlu0 %277, %v250
    %v279 = vpop.permute.xlu0 %278
    %280 = vset.pattern.permute.xlu0 0
    %281 = vperm.xlu0 %280, %v252
    %v282 = vpop.permute.xlu0 %281
    %283 = vset.pattern.permute.xlu0 0
    %284 = vperm.xlu0 %283, %v254
    %v285 = vpop.permute.xlu0 %284
    %286 = vset.pattern.permute.xlu0 0
    %287 = vperm.xlu0 %286, %v256
    %v288 = vpop.permute.xlu0 %287
    %v289 = vperm.slane %v267, %v188
    %v290 = vperm.slane %v270, %v188
    %v291 = vperm.slane %v273, %v188
    %v292 = vperm.slane %v276, %v188
    %v293 = vperm.slane %v279, %v188
    %v294 = vperm.slane %v282, %v188
    %v295 = vperm.slane %v285, %v188
    %v296 = vperm.slane %v288, %v188
    %v297 = vsel %vm197, %v290, %v289
    %v298 = vsel %vm199, %v291, %v297
    %v299 = vsel %vm201, %v292, %v298
    %v300 = vsel %vm203, %v293, %v299
    %v301 = vsel %vm205, %v294, %v300
    %v302 = vsel %vm207, %v295, %v301
    %v303 = vsel %vm209, %v296, %v302
    %v305 = vsel %vm212, %v303, 0.0
    %306 = vadd.xlane.f32.xlu0 %v305
    %v307 = vpop.xlane.xlu0 %306
    %v308 = vrcp.pop %v307
    %v310 = vperm.slane %v308, 0
    %v311 = vperm.slane %v308, 1
    %v312 = vperm.slane %v308, 2
    %v313 = vperm.slane %v308, 3
    %v314 = vperm.slane %v308, 4
    %v315 = vperm.slane %v308, 5
    %v316 = vperm.slane %v308, 6
    %v317 = vperm.slane %v308, 7
    %v326 = vmul.f32 %v242, %v310
    %v327 = vmul.f32 %v244, %v311
    %v328 = vmul.f32 %v246, %v312
    %v329 = vmul.f32 %v248, %v313
    %v330 = vmul.f32 %v250, %v314
    %v331 = vmul.f32 %v252, %v315
    %v332 = vmul.f32 %v254, %v316
    %v333 = vmul.f32 %v256, %v317
    %335 = vset.pattern.permute.xlu0 0
    %336 = vperm.xlu0 %335, %v326
    %v337 = vpop.permute.xlu0 %336
    %340 = vset.pattern.permute.xlu0 0
    %341 = vperm.xlu0 %340, %v327
    %v342 = vpop.permute.xlu0 %341
    %345 = vset.pattern.permute.xlu0 0
    %346 = vperm.xlu0 %345, %v328
    %v347 = vpop.permute.xlu0 %346
    %350 = vset.pattern.permute.xlu0 0
    %351 = vperm.xlu0 %350, %v329
    %v352 = vpop.permute.xlu0 %351
    %355 = vset.pattern.permute.xlu0 0
    %356 = vperm.xlu0 %355, %v330
    %v357 = vpop.permute.xlu0 %356
    %360 = vset.pattern.permute.xlu0 0
    %361 = vperm.xlu0 %360, %v331
    %v362 = vpop.permute.xlu0 %361
    %365 = vset.pattern.permute.xlu0 0
    %366 = vperm.xlu0 %365, %v332
    %v367 = vpop.permute.xlu0 %366
    %370 = vset.pattern.permute.xlu0 0
    %371 = vperm.xlu0 %370, %v333
    %v372 = vpop.permute.xlu0 %371
    %v374 = vmul.f32 %v337, %v53
    %v375 = vmul.f32 %v342, %v54
    %v376 = vmul.f32 %v347, %v55
    %v377 = vmul.f32 %v352, %v56
    %v378 = vmul.f32 %v357, %v57
    %v379 = vmul.f32 %v362, %v58
    %v380 = vmul.f32 %v367, %v59
    %v381 = vmul.f32 %v372, %v60
    %v382 = vsel %vm70, %v374, 0.0
    %v383 = vrot.slane %v382, 4
    %v384 = vadd.f32 %v382, %v383
    %v385 = vrot.slane %v384, 2
    %v386 = vadd.f32 %v384, %v385
    %v387 = vrot.slane %v386, 1
    %v388 = vadd.f32 %v386, %v387
    %v389 = vsel %vm70, %v375, 0.0
    %v390 = vrot.slane %v389, 4
    %v391 = vadd.f32 %v389, %v390
    %v392 = vrot.slane %v391, 2
    %v393 = vadd.f32 %v391, %v392
    %v394 = vrot.slane %v393, 1
    %v395 = vadd.f32 %v393, %v394
    %v396 = vsel %vm70, %v376, 0.0
    %v397 = vrot.slane %v396, 4
    %v398 = vadd.f32 %v396, %v397
    %v399 = vrot.slane %v398, 2
    %v400 = vadd.f32 %v398, %v399
    %v401 = vrot.slane %v400, 1
    %v402 = vadd.f32 %v400, %v401
    %v403 = vsel %vm70, %v377, 0.0
    %v404 = vrot.slane %v403, 4
    %v405 = vadd.f32 %v403, %v404
    %v406 = vrot.slane %v405, 2
    %v407 = vadd.f32 %v405, %v406
    %v408 = vrot.slane %v407, 1
    %v409 = vadd.f32 %v407, %v408
    %v410 = vsel %vm70, %v378, 0.0
    %v411 = vrot.slane %v410, 4
    %v412 = vadd.f32 %v410, %v411
    %v413 = vrot.slane %v412, 2
    %v414 = vadd.f32 %v412, %v413
    %v415 = vrot.slane %v414, 1
    %v416 = vadd.f32 %v414, %v415
    %v417 = vsel %vm70, %v379, 0.0
    %v418 = vrot.slane %v417, 4
    %v419 = vadd.f32 %v417, %v418
    %v420 = vrot.slane %v419, 2
    %v421 = vadd.f32 %v419, %v420
    %v422 = vrot.slane %v421, 1
    %v423 = vadd.f32 %v421, %v422
    %v424 = vsel %vm70, %v380, 0.0
    %v425 = vrot.slane %v424, 4
    %v426 = vadd.f32 %v424, %v425
    %v427 = vrot.slane %v426, 2
    %v428 = vadd.f32 %v426, %v427
    %v429 = vrot.slane %v428, 1
    %v430 = vadd.f32 %v428, %v429
    %v431 = vsel %vm70, %v381, 0.0
    %v432 = vrot.slane %v431, 4
    %v433 = vadd.f32 %v431, %v432
    %v434 = vrot.slane %v433, 2
    %v435 = vadd.f32 %v433, %v434
    %v436 = vrot.slane %v435, 1
    %v437 = vadd.f32 %v435, %v436
    %v438 = vperm.slane %v337, %v188
    %v439 = vperm.slane %v342, %v188
    %v440 = vperm.slane %v347, %v188
    %v441 = vperm.slane %v352, %v188
    %v442 = vperm.slane %v357, %v188
    %v443 = vperm.slane %v362, %v188
    %v444 = vperm.slane %v367, %v188
    %v445 = vperm.slane %v372, %v188
    %v446 = vsel %vm197, %v439, %v438
    %v447 = vsel %vm199, %v440, %v446
    %v448 = vsel %vm201, %v441, %v447
    %v449 = vsel %vm203, %v442, %v448
    %v450 = vsel %vm205, %v443, %v449
    %v451 = vsel %vm207, %v444, %v450
    %v452 = vsel %vm209, %v445, %v451
    %454 = vst.msk [vmem:[#allocation8] sm:$0xff] %vm212, %v452
    %v463 = vsel %vm197, %v395, %v388
    %v464 = vsel %vm199, %v402, %v463
    %v465 = vsel %vm201, %v409, %v464
    %v466 = vsel %vm203, %v416, %v465
    %v467 = vsel %vm205, %v423, %v466
    %v468 = vsel %vm207, %v430, %v467
    %v469 = vsel %vm209, %v437, %v468
    %471 = vst.msk [vmem:[#allocation7] sm:$0xff] %vm70, %v469
    // Predicated region
    $region26: #{tpu_custom_call.1} parent=1 // pred_check
      _
    $region27: #{tpu_custom_call.1} parent=1 // pred_check_branch
      %473 = sbr.rel (0) target = $region29
    $region28: #{tpu_custom_call.1} parent=1 // pred_region
      %475 = vsyncadd [#allocation4], 0
      %s477 = sshll.u32 [#allocation7], 4
      %s478 = int_to_ptr.vmem [resolvable:$true] %s477
      %s479 = sshll.u32 %s4, 4
      %s480 = int_to_ptr.hbm [resolvable:$true] %s479
      %482 = dma.vmem_to_hbm [thread:$0]  %s478, 128, %s480, [#allocation4]
    $region29: #{tpu_custom_call.1} parent=1 // pred_fallthru
      _
    // Predicated region
    $region30: #{tpu_custom_call.1} parent=1 // pred_check
      _
    $region31: #{tpu_custom_call.1} parent=1 // pred_check_branch
      %484 = sbr.rel (0) target = $region33
    $region32: #{tpu_custom_call.1} parent=1 // pred_region
      %486 = vsyncadd [#allocation9], 0
      %s488 = sshll.u32 [#allocation8], 4
      %s489 = int_to_ptr.vmem [resolvable:$true] %s488
      %s490 = sshll.u32 %s5, 4
      %s491 = int_to_ptr.hbm [resolvable:$true] %s490
      %493 = dma.vmem_to_hbm [thread:$0]  %s489, 128, %s491, [#allocation9]
    $region33: #{tpu_custom_call.1} parent=1 // pred_fallthru
      _
    // Predicated region
    $region34: #{tpu_custom_call.1} parent=1 // pred_check
      _
    $region35: #{tpu_custom_call.1} parent=1 // pred_check_branch
      %495 = sbr.rel (0) target = $region37
    $region36: #{tpu_custom_call.1} parent=1 // pred_region
      %497 = dma.done [#allocation4], 128
    $region37: #{tpu_custom_call.1} parent=1 // pred_fallthru
      _
    // Predicated region
    $region38: #{tpu_custom_call.1} parent=1 // pred_check
      _
    $region39: #{tpu_custom_call.1} parent=1 // pred_check_branch
      %499 = sbr.rel (0) target = $region41
    $region40: #{tpu_custom_call.1} parent=1 // pred_region
      %501 = dma.done [#allocation9], 128
    $region41: #{tpu_custom_call.1} parent=1 // pred_fallthru
      _
    %502 = vsyncpa [#allocation3], 1
    %503 = vsyncpa [#allocation6], 1
    %504 = vsyncpa [#allocation4], 1
    %505 = vsyncpa [#allocation9], 1

</llo_original>
